<compile_context>
chip_gen: v6e
topology: v6e:2x2x1
jax: 0.10.0
libtpu: 0.0.40
codegen_flags: <defaults>
</compile_context>

<pallas_src>
import functools

import jax
import jax.numpy as jnp
from jax import lax
from jax.experimental import pallas as pl
from jax.experimental.pallas import tpu as pltpu

_LANE = 128


def _round_up(x, m):
    return (x + m - 1) // m * m


def _cdiv(a, b):
    return (a + b - 1) // b


def _mlp_kernel(x_ref, w1_ref, b1_ref, w2_ref, b2_ref, w3_ref, b3_ref, o_ref):
    # x tile: (tb, in) f32, streamed from HBM untouched.
    x = x_ref[...]

    # fc1: h1 = W1 @ x^T  -> (64, tb).  Contract the 'in' (minor) dims of both
    # operands (A @ B.T pattern); batch lands on the lane axis.
    h1 = lax.dot_general(w1_ref[...], x, (((1,), (1,)), ((), ())),
                         preferred_element_type=jnp.float32)
    h1 = jnp.maximum(h1 + b1_ref[...], 0.0)          # b1 is (64, 1), lane-broadcast

    # fc2: (16, 64) @ (64, tb) -> (16, tb) on the MXU.
    h2 = jnp.dot(w2_ref[...], h1, preferred_element_type=jnp.float32)
    h2 = jnp.maximum(h2 + b2_ref[...], 0.0)          # b2 is (16, 1)

    out_size = w3_ref.shape[1]                        # static at trace time
    if out_size == 1:
        # fc3 with out_features == 1: VPU broadcast-multiply + sublane reduce.
        # w3_ref is (16, 1) f32, b3_ref is (1, 1).
        o = jnp.sum(h2 * w3_ref[...], axis=0, keepdims=True) + b3_ref[...]
    else:
        # General tail: W3^T stored as (16, out); contract sublane dims -> (out, tb).
        o = lax.dot_general(w3_ref[...], h2, (((0,), (0,)), ((), ())),
                            preferred_element_type=jnp.float32) + b3_ref[...]

    o_ref[...] = o.astype(o_ref.dtype)                # lane-dense (out, tb) store


def prepare_params(w1, b1, w2, b2, w3, b3):
    """One-time glue outside the per-call path.  Weights stay in PyTorch (out, in)
    layout (that is exactly what the batch-on-lanes kernel wants); biases become
    (out, 1) columns for lane broadcast; w3 is transposed once to (16, out)."""
    f32 = jnp.float32
    return (
        w1.astype(f32),                    # (64, in)
        b1.reshape(-1, 1).astype(f32),     # (64, 1)
        w2.astype(f32),                    # (16, 64)
        b2.reshape(-1, 1).astype(f32),     # (16, 1)
        w3.T.astype(f32),                  # (16, out)
        b3.reshape(-1, 1).astype(f32),     # (out, 1)
    )


def _choose_tile(B, tile_b):
    """Pick the batch tile (rows per grid step) and grid size."""
    tile_b = min(int(tile_b), 16384)       # v7x has only 64 MiB physical VMEM
    if B < 2 * _LANE:
        return B, 1                        # single full-array block (any B allowed)
    # Multi-tile: tile must be a multiple of 128 (lane-dense output blocks), and
    # keep at least 2 tiles so megacore (v7x) gets both TensorCores busy.
    tb = min(tile_b, _round_up(_cdiv(B, 2), _LANE))
    tb = _round_up(max(tb, _LANE), _LANE)
    return tb, _cdiv(B, tb)


@functools.partial(jax.jit, static_argnames=("tile_b",))
def mlp_forward(x, w1, b1r, w2, b2r, w3t, b3r, *, tile_b=8192):
    """x: (B, input_size) f32.  Params must come from prepare_params()."""
    B, in_size = x.shape
    out_size = w3t.shape[1]

    tb, num_tiles = _choose_tile(B, tile_b)

    # ~2 KiB of VMEM per tile row (lane-padded x double-buffer + f32 intermediates).
    vmem_limit = (32 << 20) if tb <= 8192 else (48 << 20)

    resident = lambda a: pl.BlockSpec(a.shape, lambda i: (0, 0))

    out = pl.pallas_call(
        _mlp_kernel,
        out_shape=jax.ShapeDtypeStruct((out_size, B), jnp.float32),
        grid=(num_tiles,),
        in_specs=[
            # x: batch-tiled (rows), double-buffered by the Pallas pipeline.
            pl.BlockSpec((tb, in_size), lambda i: (i, 0)),
            # weights / biases: DMA'd once, resident in VMEM across all tiles.
            resident(w1), resident(b1r),
            resident(w2), resident(b2r),
            resident(w3t), resident(b3r),
        ],
        # Lane-dense output block (out, tb); partial last tile is masked by Pallas.
        out_specs=pl.BlockSpec((out_size, tb), lambda i: (0, i)),
        compiler_params=pltpu.CompilerParams(
            dimension_semantics=("parallel",),      # megacore on v7x, no-op elsewhere
            vmem_limit_bytes=vmem_limit),
    )(x, w1, b1r, w2, b2r, w3t, b3r)

    # (1, B) and (B, 1) share the same row-major layout -> free reshape.
    if out_size == 1:
        return out.reshape(B, 1)
    return out.T


def init_params(key, input_size, output_size=1):
    """Deterministic init mimicking PyTorch nn.Linear defaults (uniform +-1/sqrt(fan_in))."""
    dims = [(64, input_size), (16, 64), (output_size, 16)]
    params = []
    for (out_d, in_d) in dims:
        key, kw, kb = jax.random.split(key, 3)
        bound = 1.0 / jnp.sqrt(in_d)
        w = jax.random.uniform(kw, (out_d, in_d), jnp.float32, -bound, bound)
        b = jax.random.uniform(kb, (out_d,), jnp.float32, -bound, bound)
        params += [w, b]
    return params


def reference_forward(x, w1, b1, w2, b2, w3, b3):
    h = jax.nn.relu(x @ w1.T + b1)
    h = jax.nn.relu(h @ w2.T + b2)
    return h @ w3.T + b3


if __name__ == "__main__":
    key = jax.random.PRNGKey(0)
    input_size = 32

    kx1, kx2, kp = jax.random.split(key, 3)
    torch_params = init_params(kp, input_size, output_size=1)
    params = prepare_params(*torch_params)

    # Small batch: single full-array block, grid=(1,).
    x_small = jax.random.normal(kx1, (8, input_size), jnp.float32)
    out_small = mlp_forward(x_small, *params)
    jax.block_until_ready(out_small)
    ref_small = reference_forward(x_small, *torch_params)
    assert out_small.shape == (8, 1), out_small.shape
    assert jnp.allclose(out_small, ref_small, atol=1e-4, rtol=1e-4), "mismatch (small batch)"

    # Multi-tile + ragged last tile: 300 rows with 128-row tiles -> 3 tiles,
    # last tile has 44 valid rows (OOB writes dropped, no padding pass over x).
    x_big = jax.random.normal(kx2, (300, input_size), jnp.float32)
    out_big = mlp_forward(x_big, *params, tile_b=128)
    jax.block_until_ready(out_big)
    ref_big = reference_forward(x_big, *torch_params)
    assert out_big.shape == (300, 1), out_big.shape
    assert jnp.allclose(out_big, ref_big, atol=1e-4, rtol=1e-4), "mismatch (ragged batch)"

    print("KERNEL_OK")
</pallas_src>

<mosaic_0001>
module attributes {stable_mosaic.version = 11 : i64} {
  func.func @_mlp_kernel(%arg0: i32, %arg1: memref<8x32xf32, #tpu.memory_space<vmem>>, %arg2: memref<64x32xf32, #tpu.memory_space<vmem>>, %arg3: memref<64x1xf32, #tpu.memory_space<vmem>>, %arg4: memref<16x64xf32, #tpu.memory_space<vmem>>, %arg5: memref<16x1xf32, #tpu.memory_space<vmem>>, %arg6: memref<16x1xf32, #tpu.memory_space<vmem>>, %arg7: memref<1x1xf32, #tpu.memory_space<vmem>>, %arg8: memref<1x8xf32, #tpu.memory_space<vmem>>) attributes {dimension_semantics = [#tpu.dimension_semantics<parallel>], iteration_bounds = array<i64: 1>, scalar_prefetch = 0 : i64, scratch_operands = 0 : i64, tpu.core_type = #tpu.core_type<tc>, window_params = [{transform_indices = @transform_0, window_bounds = array<i64: 8, 32>}, {pipeline_mode = #tpu.pipeline_mode<synchronous>, transform_indices = @transform_1, window_bounds = array<i64: 64, 32>}, {pipeline_mode = #tpu.pipeline_mode<synchronous>, transform_indices = @transform_2, window_bounds = array<i64: 64, 1>}, {pipeline_mode = #tpu.pipeline_mode<synchronous>, transform_indices = @transform_3, window_bounds = array<i64: 16, 64>}, {pipeline_mode = #tpu.pipeline_mode<synchronous>, transform_indices = @transform_4, window_bounds = array<i64: 16, 1>}, {pipeline_mode = #tpu.pipeline_mode<synchronous>, transform_indices = @transform_5, window_bounds = array<i64: 16, 1>}, {pipeline_mode = #tpu.pipeline_mode<synchronous>, transform_indices = @transform_6, window_bounds = array<i64: 1, 1>}, {transform_indices = @transform_7, window_bounds = array<i64: 1, 8>}]} {
    %c0 = arith.constant 0 : index
    %c0_0 = arith.constant 0 : index
    %0 = vector.load %arg1[%c0, %c0_0] : memref<8x32xf32, #tpu.memory_space<vmem>>, vector<8x32xf32>
    %c0_1 = arith.constant 0 : index
    %c0_2 = arith.constant 0 : index
    %1 = vector.load %arg2[%c0_1, %c0_2] : memref<64x32xf32, #tpu.memory_space<vmem>>, vector<64x32xf32>
    %cst = arith.constant dense<0.000000e+00> : vector<64x8xf32>
    %2 = tpu.matmul %1, %0, %cst {dimension_numbers = #tpu.dot_dimension_numbers<[1], [1], [0], [0], [0, 0, 1, 0], [], []>} : vector<64x32xf32>, vector<8x32xf32>, vector<64x8xf32> -> vector<64x8xf32>
    %c0_3 = arith.constant 0 : index
    %c0_4 = arith.constant 0 : index
    %3 = vector.load %arg3[%c0_3, %c0_4] : memref<64x1xf32, #tpu.memory_space<vmem>>, vector<64x1xf32>
    %4 = vector.broadcast %3 : vector<64x1xf32> to vector<64x8xf32>
    %5 = arith.addf %2, %4 : vector<64x8xf32>
    %cst_5 = arith.constant 0.000000e+00 : f32
    %6 = vector.broadcast %cst_5 : f32 to vector<64x8xf32>
    %7 = arith.maximumf %5, %6 : vector<64x8xf32>
    %c0_6 = arith.constant 0 : index
    %c0_7 = arith.constant 0 : index
    %8 = vector.load %arg4[%c0_6, %c0_7] : memref<16x64xf32, #tpu.memory_space<vmem>>, vector<16x64xf32>
    %cst_8 = arith.constant dense<0.000000e+00> : vector<16x8xf32>
    %9 = tpu.matmul %8, %7, %cst_8 {dimension_numbers = #tpu.dot_dimension_numbers<[1], [0], [0], [1], [0, 0, 1, 1], [], []>} : vector<16x64xf32>, vector<64x8xf32>, vector<16x8xf32> -> vector<16x8xf32>
    %c0_9 = arith.constant 0 : index
    %c0_10 = arith.constant 0 : index
    %10 = vector.load %arg5[%c0_9, %c0_10] : memref<16x1xf32, #tpu.memory_space<vmem>>, vector<16x1xf32>
    %11 = vector.broadcast %10 : vector<16x1xf32> to vector<16x8xf32>
    %12 = arith.addf %9, %11 : vector<16x8xf32>
    %cst_11 = arith.constant 0.000000e+00 : f32
    %13 = vector.broadcast %cst_11 : f32 to vector<16x8xf32>
    %14 = arith.maximumf %12, %13 : vector<16x8xf32>
    %c0_12 = arith.constant 0 : index
    %c0_13 = arith.constant 0 : index
    %15 = vector.load %arg6[%c0_12, %c0_13] : memref<16x1xf32, #tpu.memory_space<vmem>>, vector<16x1xf32>
    %16 = vector.broadcast %15 : vector<16x1xf32> to vector<16x8xf32>
    %17 = arith.mulf %14, %16 : vector<16x8xf32>
    %cst_14 = arith.constant dense<0.000000e+00> : vector<8xf32>
    %18 = vector.multi_reduction <add>, %17, %cst_14 [0] : vector<16x8xf32> to vector<8xf32>
    %19 = vector.shape_cast %18 : vector<8xf32> to vector<1x8xf32>
    %c0_15 = arith.constant 0 : index
    %c0_16 = arith.constant 0 : index
    %20 = vector.load %arg7[%c0_15, %c0_16] : memref<1x1xf32, #tpu.memory_space<vmem>>, vector<1x1xf32>
    %21 = vector.broadcast %20 : vector<1x1xf32> to vector<1x8xf32>
    %22 = arith.addf %19, %21 : vector<1x8xf32>
    %c0_17 = arith.constant 0 : index
    %c0_18 = arith.constant 0 : index
    %23 = vector.load %arg8[%c0_17, %c0_18] : memref<1x8xf32, #tpu.memory_space<vmem>>, vector<1x8xf32>
    tpu.vector_store %arg8[%c0_17, %c0_18], %22 {strides = array<i32>} : memref<1x8xf32, #tpu.memory_space<vmem>>, vector<1x8xf32>,
    return
  }
  func.func @transform_0(%arg0: i32) -> (i32, i32) {
    %c0_i32 = arith.constant 0 : i32
    %c0_i32_0 = arith.constant 0 : i32
    return %arg0, %c0_i32 : i32, i32
  }
  func.func @transform_1(%arg0: i32) -> (i32, i32) {
    %c0_i32 = arith.constant 0 : i32
    %c0_i32_0 = arith.constant 0 : i32
    %c0_i32_1 = arith.constant 0 : i32
    return %c0_i32, %c0_i32_0 : i32, i32
  }
  func.func @transform_2(%arg0: i32) -> (i32, i32) {
    %c0_i32 = arith.constant 0 : i32
    %c0_i32_0 = arith.constant 0 : i32
    %c0_i32_1 = arith.constant 0 : i32
    return %c0_i32, %c0_i32_0 : i32, i32
  }
  func.func @transform_3(%arg0: i32) -> (i32, i32) {
    %c0_i32 = arith.constant 0 : i32
    %c0_i32_0 = arith.constant 0 : i32
    %c0_i32_1 = arith.constant 0 : i32
    return %c0_i32, %c0_i32_0 : i32, i32
  }
  func.func @transform_4(%arg0: i32) -> (i32, i32) {
    %c0_i32 = arith.constant 0 : i32
    %c0_i32_0 = arith.constant 0 : i32
    %c0_i32_1 = arith.constant 0 : i32
    return %c0_i32, %c0_i32_0 : i32, i32
  }
  func.func @transform_5(%arg0: i32) -> (i32, i32) {
    %c0_i32 = arith.constant 0 : i32
    %c0_i32_0 = arith.constant 0 : i32
    %c0_i32_1 = arith.constant 0 : i32
    return %c0_i32, %c0_i32_0 : i32, i32
  }
  func.func @transform_6(%arg0: i32) -> (i32, i32) {
    %c0_i32 = arith.constant 0 : i32
    %c0_i32_0 = arith.constant 0 : i32
    %c0_i32_1 = arith.constant 0 : i32
    return %c0_i32, %c0_i32_0 : i32, i32
  }
  func.func @transform_7(%arg0: i32) -> (i32, i32) {
    %c0_i32 = arith.constant 0 : i32
    %c0_i32_0 = arith.constant 0 : i32
    return %c0_i32, %arg0 : i32, i32
  }
}

</mosaic_0001>

<llo_original>
// kernel: mlp_forward.1
$region0: #{mlp_forward.1}
  #allocation0 [shape = 'u32[]', space=smem, size = 0x4, offset = 0x4, fixed_abs, tag = 'smem constant byte address 0x4 - core index']
  #allocation1 [shape = 'u32[144,128]{1,0:T(1,128)}', space=vmem, size = 0x12000, scoped, tag = 'internal scratch']
  #allocation2 [shape = 'f32[1,1]{1,0:T(1,128)S(1)}', space=vmem, size = 0x200, scoped, tag = 'scoped memory for mlp_forward.1']
  %s0 = inlined_call_operand.vmem [shape: f32[8,32], index: 0, kind: input, shape index: {}]
  %s1 = inlined_call_operand.vmem [shape: f32[64,32], index: 1, kind: input, shape index: {}]
  %s2 = inlined_call_operand.vmem [shape: f32[64,1], index: 2, kind: input, shape index: {}]
  %s3 = inlined_call_operand.vmem [shape: f32[16,64], index: 3, kind: input, shape index: {}]
  %s4 = inlined_call_operand.vmem [shape: f32[16,1], index: 4, kind: input, shape index: {}]
  %s5 = inlined_call_operand.vmem [shape: f32[16,1], index: 5, kind: input, shape index: {}]
  %s6 = inlined_call_operand.<no memory space> [shape: f32[1,1], index: 6, kind: input, shape index: {}]
  %s7 = inlined_call_operand.hbm [shape: f32[1,8], index: 7, kind: output, shape index: {}]
  %s8 = sld [smem:[#allocation0]]
  $region38: #{mlp_forward.1} parent=0
    _
  %s10 = ssub.s32 1, %s8
  %s11 = scalar_select 0, %s10, %s8
  %v12 = vstv %s6
  %13 = vst [vmem:[#allocation2] sm:$0x1] %v12
  $region1: #{mlp_forward.1} parent=0
    #allocation3 [shape = 'u8[512]{0}', space=vmem, size = 0x400, scoped, tag = 'output window, operand 0, single buffered']
    #allocation4 [shape = 's32[1]{0}', space=sflag, size = 0x4, scoped, tag = 'scoped memory for mlp_forward.1']
    %14 = vsyncpa [#allocation4], 0
    // Predicated region
    $region2: #{mlp_forward.1} parent=1 // pred_check
      _
    $region3: #{mlp_forward.1} parent=1 // pred_check_branch
      %16 = sbr.rel (0) target = $region5
    $region4: #{mlp_forward.1} parent=1 // pred_region
      _
    $region5: #{mlp_forward.1} parent=1 // pred_fallthru
      _
    // Predicated region
    $region6: #{mlp_forward.1} parent=1 // pred_check
      _
    $region7: #{mlp_forward.1} parent=1 // pred_check_branch
      %18 = sbr.rel (0) target = $region9
    $region8: #{mlp_forward.1} parent=1 // pred_region
      _
    $region9: #{mlp_forward.1} parent=1 // pred_fallthru
      _
    // Predicated region
    $region10: #{mlp_forward.1} parent=1 // pred_check
      _
    $region11: #{mlp_forward.1} parent=1 // pred_check_branch
      %20 = sbr.rel (0) target = $region13
    $region12: #{mlp_forward.1} parent=1 // pred_region
      _
    $region13: #{mlp_forward.1} parent=1 // pred_fallthru
      _
    // Predicated region
    $region14: #{mlp_forward.1} parent=1 // pred_check
      _
    $region15: #{mlp_forward.1} parent=1 // pred_check_branch
      %22 = sbr.rel (0) target = $region17
    $region16: #{mlp_forward.1} parent=1 // pred_region
      _
    $region17: #{mlp_forward.1} parent=1 // pred_fallthru
      _
    // Predicated region
    $region18: #{mlp_forward.1} parent=1 // pred_check
      _
    $region19: #{mlp_forward.1} parent=1 // pred_check_branch
      %24 = sbr.rel (0) target = $region21
    $region20: #{mlp_forward.1} parent=1 // pred_region
      _
    $region21: #{mlp_forward.1} parent=1 // pred_fallthru
      _
    // Predicated region
    $region22: #{mlp_forward.1} parent=1 // pred_check
      _
    $region23: #{mlp_forward.1} parent=1 // pred_check_branch
      %26 = sbr.rel (0) target = $region25
    $region24: #{mlp_forward.1} parent=1 // pred_region
      _
    $region25: #{mlp_forward.1} parent=1 // pred_fallthru
      _
    // Predicated region
    $region26: #{mlp_forward.1} parent=1 // pred_check
      _
    $region27: #{mlp_forward.1} parent=1 // pred_check_branch
      %28 = sbr.rel (0) target = $region29
    $region28: #{mlp_forward.1} parent=1 // pred_region
      _
    $region29: #{mlp_forward.1} parent=1 // pred_fallthru
      _
    %v29 = vld [vmem:[%s0] sm:$0xff]
    %v30 = vld [vmem:[%s1] sm:$0xff]
    %v31 = vld [vmem:[%s1 + $0x8] sm:$0xff]
    %v32 = vld [vmem:[%s1 + $0x10] sm:$0xff]
    %v33 = vld [vmem:[%s1 + $0x18] sm:$0xff]
    %v34 = vld [vmem:[%s1 + $0x20] sm:$0xff]
    %v35 = vld [vmem:[%s1 + $0x28] sm:$0xff]
    %v36 = vld [vmem:[%s1 + $0x30] sm:$0xff]
    %v37 = vld [vmem:[%s1 + $0x38] sm:$0xff]
    %v38 = vld [vmem:[%s2] sm:$0xff]
    %v39 = vld [vmem:[%s2 + $0x8] sm:$0xff]
    %v40 = vld [vmem:[%s2 + $0x10] sm:$0xff]
    %v41 = vld [vmem:[%s2 + $0x18] sm:$0xff]
    %v42 = vld [vmem:[%s2 + $0x20] sm:$0xff]
    %v43 = vld [vmem:[%s2 + $0x28] sm:$0xff]
    %v44 = vld [vmem:[%s2 + $0x30] sm:$0xff]
    %v45 = vld [vmem:[%s2 + $0x38] sm:$0xff]
    %47 = vset.pattern.permute.xlu0 0
    %48 = vperm.xlu0 %47, %v38
    %v49 = vpop.permute.xlu0 %48
    %52 = vset.pattern.permute.xlu0 0
    %53 = vperm.xlu0 %52, %v39
    %v54 = vpop.permute.xlu0 %53
    %57 = vset.pattern.permute.xlu0 0
    %58 = vperm.xlu0 %57, %v40
    %v59 = vpop.permute.xlu0 %58
    %62 = vset.pattern.permute.xlu0 0
    %63 = vperm.xlu0 %62, %v41
    %v64 = vpop.permute.xlu0 %63
    %67 = vset.pattern.permute.xlu0 0
    %68 = vperm.xlu0 %67, %v42
    %v69 = vpop.permute.xlu0 %68
    %72 = vset.pattern.permute.xlu0 0
    %73 = vperm.xlu0 %72, %v43
    %v74 = vpop.permute.xlu0 %73
    %77 = vset.pattern.permute.xlu0 0
    %78 = vperm.xlu0 %77, %v44
    %v79 = vpop.permute.xlu0 %78
    %82 = vset.pattern.permute.xlu0 0
    %83 = vperm.xlu0 %82, %v45
    %v84 = vpop.permute.xlu0 %83
    %vm86 = vcmask 261120
    %v88 = vsel %vm86, %v30, 0
    %v91 = vsel %vm86, %v31, 0
    %v94 = vsel %vm86, %v32, 0
    %v97 = vsel %vm86, %v33, 0
    %v100 = vsel %vm86, %v34, 0
    %v103 = vsel %vm86, %v35, 0
    %v106 = vsel %vm86, %v36, 0
    %v109 = vsel %vm86, %v37, 0
    %v112 = vsel %vm86, %v29, 0
    %114 = vmatprep.subr.mxu0 0.0
    %115 = vmatpush1.xpose.msra.mxu0 0.0
    %116 = vmatprep.subr.mxu0 0.0
    %117 = vmatpush1.xpose.msra.mxu0 0.0
    %118 = vmatprep.subr.mxu0 0.0
    %119 = vmatpush1.xpose.msra.mxu0 0.0
    %120 = vmatprep.subr.mxu0 0.0
    %121 = vmatpush1.xpose.msra.mxu0 0.0
    %122 = vmatprep.subr.mxu0 0.0
    %123 = vmatpush1.xpose.msra.mxu0 0.0
    %124 = vmatprep.subr.mxu0 0.0
    %125 = vmatpush1.xpose.msra.mxu0 0.0
    %126 = vmatprep.subr.mxu0 0.0
    %127 = vmatpush1.xpose.msra.mxu0 0.0
    %128 = vmatprep.subr.mxu0 0.0
    %129 = vmatpush1.xpose.msra.mxu0 0.0
    %130 = vmatprep.subr.mxu0 0.0
    %131 = vmatpush1.xpose.msra.mxu0 0.0
    %132 = vmatprep.subr.mxu0 0.0
    %133 = vmatpush1.xpose.msra.mxu0 0.0
    %134 = vmatprep.subr.mxu0 0.0
    %135 = vmatpush1.xpose.msra.mxu0 0.0
    %136 = vmatprep.subr.mxu0 0.0
    %137 = vmatpush1.xpose.msra.mxu0 0.0
    %138 = vmatprep.subr.mxu0 0.0
    %139 = vmatpush1.xpose.msra.mxu0 0.0
    %140 = vmatprep.subr.mxu0 0.0
    %141 = vmatpush1.xpose.msra.mxu0 0.0
    %142 = vmatprep.subr.mxu0 0.0
    %143 = vmatpush1.xpose.msra.mxu0 0.0
    %144 = vmatprep.subr.mxu0 0.0
    %145 = vmatpush1.xpose.msra.mxu0 %v112
    %146 = vmatprep.subr.mxu0 0.0
    %147 = vmatpush2.xpose.msra.mxu0 0.0
    %148 = vmatprep.subr.mxu0 0.0
    %149 = vmatpush2.xpose.msra.mxu0 0.0
    %150 = vmatprep.subr.mxu0 0.0
    %151 = vmatpush2.xpose.msra.mxu0 0.0
    %152 = vmatprep.subr.mxu0 0.0
    %153 = vmatpush2.xpose.msra.mxu0 0.0
    %154 = vmatprep.subr.mxu0 0.0
    %155 = vmatpush2.xpose.msra.mxu0 0.0
    %156 = vmatprep.subr.mxu0 0.0
    %157 = vmatpush2.xpose.msra.mxu0 0.0
    %158 = vmatprep.subr.mxu0 0.0
    %159 = vmatpush2.xpose.msra.mxu0 0.0
    %160 = vmatprep.subr.mxu0 0.0
    %161 = vmatpush2.xpose.msra.mxu0 0.0
    %162 = vmatprep.subr.mxu0 0.0
    %163 = vmatpush2.xpose.msra.mxu0 0.0
    %164 = vmatprep.subr.mxu0 0.0
    %165 = vmatpush2.xpose.msra.mxu0 0.0
    %166 = vmatprep.subr.mxu0 0.0
    %167 = vmatpush2.xpose.msra.mxu0 0.0
    %168 = vmatprep.subr.mxu0 0.0
    %169 = vmatpush2.xpose.msra.mxu0 0.0
    %170 = vmatprep.subr.mxu0 0.0
    %171 = vmatpush2.xpose.msra.mxu0 0.0
    %172 = vmatprep.subr.mxu0 0.0
    %173 = vmatpush2.xpose.msra.mxu0 0.0
    %174 = vmatprep.subr.mxu0 0.0
    %175 = vmatpush2.xpose.msra.mxu0 0.0
    %176 = vmatprep.subr.mxu0 0.0
    %177 = vmatpush2.xpose.msra.mxu0 0.0
    %178 = vmatprep.mubr.f32.mxu0 0.0
    %179 = vmatmul.mubr.f32.gmra.mxu0 %v88
    %v180 = vpop.f32.mrf.mxu0
    %v181 = vadd.f32 %v49, %v180
    %v182 = vpop.f32.mrf.mxu0
    %183 = vmatprep.mubr.f32.mxu0 0.0
    %184 = vmatmul.mubr.f32.gmra.mxu0 %v91
    %v185 = vpop.f32.mrf.mxu0
    %v186 = vadd.f32 %v54, %v185
    %v187 = vpop.f32.mrf.mxu0
    %188 = vmatprep.mubr.f32.mxu0 0.0
    %189 = vmatmul.mubr.f32.gmra.mxu0 %v94
    %v190 = vpop.f32.mrf.mxu0
    %v191 = vadd.f32 %v59, %v190
    %v192 = vpop.f32.mrf.mxu0
    %193 = vmatprep.mubr.f32.mxu0 0.0
    %194 = vmatmul.mubr.f32.gmra.mxu0 %v97
    %v195 = vpop.f32.mrf.mxu0
    %v196 = vadd.f32 %v64, %v195
    %v197 = vpop.f32.mrf.mxu0
    %198 = vmatprep.mubr.f32.mxu0 0.0
    %199 = vmatmul.mubr.f32.gmra.mxu0 %v100
    %v200 = vpop.f32.mrf.mxu0
    %v201 = vadd.f32 %v69, %v200
    %v202 = vpop.f32.mrf.mxu0
    %203 = vmatprep.mubr.f32.mxu0 0.0
    %204 = vmatmul.mubr.f32.gmra.mxu0 %v103
    %v205 = vpop.f32.mrf.mxu0
    %v206 = vadd.f32 %v74, %v205
    %v207 = vpop.f32.mrf.mxu0
    %208 = vmatprep.mubr.f32.mxu0 0.0
    %209 = vmatmul.mubr.f32.gmra.mxu0 %v106
    %v210 = vpop.f32.mrf.mxu0
    %v211 = vadd.f32 %v79, %v210
    %v212 = vpop.f32.mrf.mxu0
    %213 = vmatprep.mubr.f32.mxu0 0.0
    %214 = vmatmul.mubr.f32.gmra.mxu0 %v109
    %v215 = vpop.f32.mrf.mxu0
    %v216 = vadd.f32 %v84, %v215
    %v217 = vpop.f32.mrf.mxu0
    %218 = vdwg.mxu0
    %v219 = vmax.f32 %v181, 0.0
    %v220 = vmax.f32 %v186, 0.0
    %v221 = vmax.f32 %v191, 0.0
    %v222 = vmax.f32 %v196, 0.0
    %v223 = vmax.f32 %v201, 0.0
    %v224 = vmax.f32 %v206, 0.0
    %v225 = vmax.f32 %v211, 0.0
    %v226 = vmax.f32 %v216, 0.0
    %v227 = vld [vmem:[%s3] sm:$0xff]
    %v228 = vld [vmem:[%s3 + $0x8] sm:$0xff]
    %v229 = vld [vmem:[%s4] sm:$0xff]
    %v230 = vld [vmem:[%s4 + $0x8] sm:$0xff]
    %232 = vset.pattern.permute.xlu0 0
    %233 = vperm.xlu0 %232, %v229
    %v234 = vpop.permute.xlu0 %233
    %237 = vset.pattern.permute.xlu0 0
    %238 = vperm.xlu0 %237, %v230
    %v239 = vpop.permute.xlu0 %238
    %vm241 = vcmask 523264
    %v243 = vsel %vm241, %v227, 0
    %v246 = vsel %vm241, %v228, 0
    %248 = vmatprep.subr.mxu0 0.0
    %249 = vmatpush1.msra.mxu0 0.0
    %250 = vmatprep.subr.mxu0 0.0
    %251 = vmatpush1.msra.mxu0 0.0
    %252 = vmatprep.subr.mxu0 0.0
    %253 = vmatpush1.msra.mxu0 0.0
    %254 = vmatprep.subr.mxu0 0.0
    %255 = vmatpush1.msra.mxu0 0.0
    %256 = vmatprep.subr.mxu0 0.0
    %257 = vmatpush1.msra.mxu0 0.0
    %258 = vmatprep.subr.mxu0 0.0
    %259 = vmatpush1.msra.mxu0 0.0
    %260 = vmatprep.subr.mxu0 0.0
    %261 = vmatpush1.msra.mxu0 0.0
    %262 = vmatprep.subr.mxu0 0.0
    %263 = vmatpush1.msra.mxu0 0.0
    %264 = vmatprep.subr.mxu0 0.0
    %265 = vmatpush1.msra.mxu0 %v226
    %266 = vmatprep.subr.mxu0 0.0
    %267 = vmatpush1.msra.mxu0 %v225
    %268 = vmatprep.subr.mxu0 0.0
    %269 = vmatpush1.msra.mxu0 %v224
    %270 = vmatprep.subr.mxu0 0.0
    %271 = vmatpush1.msra.mxu0 %v223
    %272 = vmatprep.subr.mxu0 0.0
    %273 = vmatpush1.msra.mxu0 %v222
    %274 = vmatprep.subr.mxu0 0.0
    %275 = vmatpush1.msra.mxu0 %v221
    %276 = vmatprep.subr.mxu0 0.0
    %277 = vmatpush1.msra.mxu0 %v220
    %278 = vmatprep.subr.mxu0 0.0
    %279 = vmatpush1.msra.mxu0 %v219
    %280 = vmatprep.subr.mxu0 0.0
    %281 = vmatpush2.msra.mxu0 0.0
    %282 = vmatprep.subr.mxu0 0.0
    %283 = vmatpush2.msra.mxu0 0.0
    %284 = vmatprep.subr.mxu0 0.0
    %285 = vmatpush2.msra.mxu0 0.0
    %286 = vmatprep.subr.mxu0 0.0
    %287 = vmatpush2.msra.mxu0 0.0
    %288 = vmatprep.subr.mxu0 0.0
    %289 = vmatpush2.msra.mxu0 0.0
    %290 = vmatprep.subr.mxu0 0.0
    %291 = vmatpush2.msra.mxu0 0.0
    %292 = vmatprep.subr.mxu0 0.0
    %293 = vmatpush2.msra.mxu0 0.0
    %294 = vmatprep.subr.mxu0 0.0
    %295 = vmatpush2.msra.mxu0 0.0
    %296 = vmatprep.subr.mxu0 0.0
    %297 = vmatpush2.msra.mxu0 0.0
    %298 = vmatprep.subr.mxu0 0.0
    %299 = vmatpush2.msra.mxu0 0.0
    %300 = vmatprep.subr.mxu0 0.0
    %301 = vmatpush2.msra.mxu0 0.0
    %302 = vmatprep.subr.mxu0 0.0
    %303 = vmatpush2.msra.mxu0 0.0
    %304 = vmatprep.subr.mxu0 0.0
    %305 = vmatpush2.msra.mxu0 0.0
    %306 = vmatprep.subr.mxu0 0.0
    %307 = vmatpush2.msra.mxu0 0.0
    %308 = vmatprep.subr.mxu0 0.0
    %309 = vmatpush2.msra.mxu0 0.0
    %310 = vmatprep.subr.mxu0 0.0
    %311 = vmatpush2.msra.mxu0 0.0
    %312 = vmatprep.mubr.f32.mxu0 0.0
    %313 = vmatmul.mubr.f32.gmra.mxu0 %v243
    %v314 = vpop.f32.mrf.mxu0
    %v315 = vadd.f32 %v234, %v314
    %v316 = vpop.f32.mrf.mxu0
    %317 = vmatprep.mubr.f32.mxu0 0.0
    %318 = vmatmul.mubr.f32.gmra.mxu0 %v246
    %v319 = vpop.f32.mrf.mxu0
    %v320 = vadd.f32 %v239, %v319
    %v321 = vpop.f32.mrf.mxu0
    %322 = vdwg.mxu0
    %v323 = vmax.f32 %v315, 0.0
    %v324 = vmax.f32 %v320, 0.0
    %v325 = vld [vmem:[%s5] sm:$0xff]
    %v326 = vld [vmem:[%s5 + $0x8] sm:$0xff]
    %328 = vset.pattern.permute.xlu0 0
    %329 = vperm.xlu0 %328, %v325
    %v330 = vpop.permute.xlu0 %329
    %333 = vset.pattern.permute.xlu0 0
    %334 = vperm.xlu0 %333, %v326
    %v335 = vpop.permute.xlu0 %334
    %v337 = vmul.f32 %v323, %v330
    %v338 = vmul.f32 %v324, %v335
    %vm339 = vcmask 64512
    %v340 = vsel %vm339, %v337, 0.0
    %v341 = vsel %vm339, %v338, 0.0
    %v342 = vadd.f32 %v340, %v341
    %v343 = vrot.slane %v342, 4
    %v344 = vadd.f32 %v342, %v343
    %v345 = vrot.slane %v344, 2
    %v346 = vadd.f32 %v344, %v345
    %v347 = vrot.slane %v346, 1
    %v348 = vadd.f32 %v346, %v347
    %v349 = vld [vmem:[#allocation2] sm:$0x1]
    %351 = vset.pattern.permute.xlu0 0
    %352 = vperm.xlu0 %351, %v349
    %v353 = vpop.permute.xlu0 %352
    %v355 = vlaneseq
    %v356 = vshrl.u32 %v355, 7
    %v357 = vsub.s32 0, %v356
    %v358 = vrot.slane %v353, %v357
    %v359 = vadd.f32 %v348, %v358
    %vm360 = vcmask 57344
    %361 = vst.msk [vmem:[#allocation3] sm:$0x1] %vm360, %v359
    // Predicated region
    $region30: #{mlp_forward.1} parent=1 // pred_check
      _
    $region31: #{mlp_forward.1} parent=1 // pred_check_branch
      %363 = sbr.rel (0) target = $region33
    $region32: #{mlp_forward.1} parent=1 // pred_region
      %s365 = ssub.s32 16, 16
      %366 = vsyncadd [#allocation4], %s365
      %s368 = sshll.u32 [#allocation3], 4
      %s369 = int_to_ptr.vmem [resolvable:$true] %s368
      %371 = dma.vmem_to_hbm [thread:$0]  %s369, 16, %s7, [#allocation4]
    $region33: #{mlp_forward.1} parent=1 // pred_fallthru
      _
    // Predicated region
    $region34: #{mlp_forward.1} parent=1 // pred_check
      _
    $region35: #{mlp_forward.1} parent=1 // pred_check_branch
      %373 = sbr.rel (0) target = $region37
    $region36: #{mlp_forward.1} parent=1 // pred_region
      %374 = dma.done [#allocation4], 16
    $region37: #{mlp_forward.1} parent=1 // pred_fallthru
      _
    %375 = vsyncpa [#allocation4], 1

</llo_original>
